<compile_context>
chip_gen: v7x
topology: tpu7x:2x2x1
jax: 0.10.0
libtpu: 0.0.40
codegen_flags: <defaults>
</compile_context>

<pallas_src>
import functools

import jax
import jax.numpy as jnp
from jax.experimental import pallas as pl
from jax.experimental.pallas import tpu as pltpu


_SUBLANE = 8
# Budget for the double-buffered, row-tiled streams of one kernel. Fits inside
# the default scoped-VMEM of every generation (v5e 16 MiB, v6e/v7x 32 MiB)
# while leaving room for resident weights / params.
_TILE_BUDGET_BYTES = 8 * 1024 * 1024
_VMEM_LIMIT_BYTES = 32 * 1024 * 1024  # safe on v5e/v6e (128 MiB) and v7x (64 MiB)


def _round_up(n, m):
    return ((n + m - 1) // m) * m


def _pick_block_rows(rows, d, n_streams, itemsize=4):
    """Largest row tile (multiple of 8) whose double-buffered streams fit budget."""
    per_row = max(1, n_streams * 2 * d * itemsize)
    br = _TILE_BUDGET_BYTES // per_row
    br = min(br, 1024, _round_up(rows, _SUBLANE))
    br = max(_SUBLANE, (br // _SUBLANE) * _SUBLANE)
    return int(br)


def _pad_rows(arr, padded_rows):
    rows = arr.shape[0]
    if rows == padded_rows:
        return arr
    return jnp.pad(arr, ((0, padded_rows - rows), (0, 0)))


def _dropout_threshold(p):
    # keep iff bits >= threshold  ->  P(keep) = 1 - p  (exact in uint32 domain)
    return min(int(round(float(p) * (2.0 ** 32))), 2 ** 32 - 1)


# ---------------------------------------------------------------------------
# Kernel 1: LayerNorm (unbiased std, eps added to std — matches the module)
# ---------------------------------------------------------------------------
def _layernorm_kernel(x_ref, a_ref, b_ref, o_ref, *, eps, d):
    x = x_ref[...].astype(jnp.float32)
    mean = jnp.mean(x, axis=-1, keepdims=True)
    diff = x - mean
    var = jnp.sum(diff * diff, axis=-1, keepdims=True) * (1.0 / max(d - 1, 1))
    inv = 1.0 / (jnp.sqrt(var) + eps)          # per-row inverse, broadcast-mult below
    y = a_ref[...].astype(jnp.float32) * (diff * inv) + b_ref[...].astype(jnp.float32)
    o_ref[...] = y.astype(o_ref.dtype)


def layer_norm_pallas(x2d, a_2, b_2, *, eps=1e-6):
    rows, d = x2d.shape
    block_rows = _pick_block_rows(rows, d, n_streams=2)    # x in, out
    padded = _round_up(rows, block_rows)
    xp = _pad_rows(x2d, padded)
    row_spec = pl.BlockSpec((block_rows, d), lambda i: (i, 0))
    const_spec = pl.BlockSpec((1, d), lambda i: (0, 0))     # stays VMEM-resident
    out = pl.pallas_call(
        functools.partial(_layernorm_kernel, eps=eps, d=d),
        out_shape=jax.ShapeDtypeStruct((padded, d), x2d.dtype),
        grid=(padded // block_rows,),
        in_specs=[row_spec, const_spec, const_spec],
        out_specs=row_spec,
        compiler_params=pltpu.CompilerParams(
            dimension_semantics=("parallel",),
            vmem_limit_bytes=_VMEM_LIMIT_BYTES),
    )(xp, a_2, b_2)
    return out[:rows]


# ---------------------------------------------------------------------------
# Kernel 2: residual add (+ optional inverted dropout on the sublayer output)
# ---------------------------------------------------------------------------
def _resid_add_kernel(x_ref, s_ref, o_ref):
    o_ref[...] = (x_ref[...].astype(jnp.float32)
                  + s_ref[...].astype(jnp.float32)).astype(o_ref.dtype)


def _resid_dropout_kernel(x_ref, s_ref, bits_ref, o_ref, *, threshold, scale):
    x = x_ref[...].astype(jnp.float32)
    s = s_ref[...].astype(jnp.float32)
    keep = bits_ref[...] >= jnp.uint32(threshold)           # integer-domain compare
    o_ref[...] = (x + jnp.where(keep, s * scale, 0.0)).astype(o_ref.dtype)


def resid_dropout_pallas(x2d, s2d, *, p=0.0, bits=None):
    rows, d = x2d.shape
    dropout = p > 0.0
    n_streams = 4 if dropout else 3                          # x, s, (bits,) out
    block_rows = _pick_block_rows(rows, d, n_streams=n_streams)
    padded = _round_up(rows, block_rows)
    xp, sp = _pad_rows(x2d, padded), _pad_rows(s2d, padded)
    row_spec = pl.BlockSpec((block_rows, d), lambda i: (i, 0))
    cp = pltpu.CompilerParams(dimension_semantics=("parallel",),
                              vmem_limit_bytes=_VMEM_LIMIT_BYTES)
    if dropout:
        kernel = functools.partial(_resid_dropout_kernel,
                                   threshold=_dropout_threshold(p),
                                   scale=1.0 / (1.0 - float(p)))
        out = pl.pallas_call(
            kernel,
            out_shape=jax.ShapeDtypeStruct((padded, d), x2d.dtype),
            grid=(padded // block_rows,),
            in_specs=[row_spec, row_spec, row_spec],
            out_specs=row_spec,
            compiler_params=cp,
        )(xp, sp, _pad_rows(bits, padded))
    else:
        out = pl.pallas_call(
            _resid_add_kernel,
            out_shape=jax.ShapeDtypeStruct((padded, d), x2d.dtype),
            grid=(padded // block_rows,),
            in_specs=[row_spec, row_spec],
            out_specs=row_spec,
            compiler_params=cp,
        )(xp, sp)
    return out[:rows]


# ---------------------------------------------------------------------------
# Kernel 3 (fused fast path for linear sublayer):
#   out = x + dropout(LN(x) @ W + bias)   — one kernel, LN output never leaves VMEM
# ---------------------------------------------------------------------------
def _fused_kernel(*refs, eps, d, threshold, scale, dropout):
    if dropout:
        x_ref, w_ref, bias_ref, a_ref, b_ref, bits_ref, o_ref = refs
    else:
        x_ref, w_ref, bias_ref, a_ref, b_ref, o_ref = refs
        bits_ref = None
    x = x_ref[...].astype(jnp.float32)
    mean = jnp.mean(x, axis=-1, keepdims=True)
    diff = x - mean
    var = jnp.sum(diff * diff, axis=-1, keepdims=True) * (1.0 / max(d - 1, 1))
    inv = 1.0 / (jnp.sqrt(var) + eps)
    normed = (a_ref[...].astype(jnp.float32) * (diff * inv)
              + b_ref[...].astype(jnp.float32))
    s = jnp.dot(normed, w_ref[...].astype(jnp.float32),
                preferred_element_type=jnp.float32) + bias_ref[...].astype(jnp.float32)
    if dropout:
        keep = bits_ref[...] >= jnp.uint32(threshold)
        s = jnp.where(keep, s * scale, 0.0)
    o_ref[...] = (x + s).astype(o_ref.dtype)


def fused_ln_linear_dropout_resid_pallas(x2d, w, bias, a_2, b_2, *,
                                         eps=1e-6, p=0.0, bits=None):
    rows, d = x2d.shape
    dropout = p > 0.0
    n_streams = 3 if dropout else 2                          # x, (bits,) out; W resident
    block_rows = _pick_block_rows(rows, d, n_streams=n_streams)
    padded = _round_up(rows, block_rows)
    xp = _pad_rows(x2d, padded)
    row_spec = pl.BlockSpec((block_rows, d), lambda i: (i, 0))
    const_spec = pl.BlockSpec((1, d), lambda i: (0, 0))
    w_spec = pl.BlockSpec((d, d), lambda i: (0, 0))          # weights stay resident
    in_specs = [row_spec, w_spec, const_spec, const_spec, const_spec]
    args = [xp, w, bias.reshape(1, d), a_2, b_2]
    threshold = _dropout_threshold(p) if dropout else 0
    scale = 1.0 / (1.0 - float(p)) if dropout else 1.0
    if dropout:
        in_specs.append(row_spec)
        args.append(_pad_rows(bits, padded))
    out = pl.pallas_call(
        functools.partial(_fused_kernel, eps=eps, d=d, threshold=threshold,
                          scale=scale, dropout=dropout),
        out_shape=jax.ShapeDtypeStruct((padded, d), x2d.dtype),
        grid=(padded // block_rows,),
        in_specs=in_specs,
        out_specs=row_spec,
        compiler_params=pltpu.CompilerParams(
            dimension_semantics=("parallel",),
            vmem_limit_bytes=_VMEM_LIMIT_BYTES),
    )(*args)
    return out[:rows]


# ---------------------------------------------------------------------------
# Module wrapper (mirrors the PyTorch module)
# ---------------------------------------------------------------------------
class ResidualSkipConnectionWithLayerNorm:
    def __init__(self, size, dropout):
        self.size = int(size)
        self.p = float(dropout)
        self.eps = 1e-6
        self.a_2 = jnp.ones((1, self.size), jnp.float32)
        self.b_2 = jnp.zeros((1, self.size), jnp.float32)

    def _dropout_bits(self, rng, rows):
        # Portable dropout entropy: drawn with the JAX PRNG in the wrapper
        # (works on real TPUs and under CPU interpret); compare/scale stays in-kernel.
        return jax.random.bits(rng, (rows, self.size), jnp.uint32)

    def __call__(self, x, sublayer, *, rng=None, training=True):
        """Generic path: arbitrary Python `sublayer` runs in plain JAX between kernels."""
        B, T, D = x.shape
        assert D == self.size
        x2 = x.reshape(B * T, D)
        normed = layer_norm_pallas(x2, self.a_2, self.b_2, eps=self.eps)
        s = sublayer(normed.reshape(B, T, D)).reshape(B * T, D)
        p = self.p if training else 0.0
        bits = None
        if p > 0.0:
            rng = jax.random.PRNGKey(0) if rng is None else rng
            bits = self._dropout_bits(rng, B * T)
        out = resid_dropout_pallas(x2, s, p=p, bits=bits)
        return out.reshape(B, T, D)

    def fused_linear(self, x, W, bias, *, rng=None, training=True):
        """Fused fast path when sublayer(h) == h @ W + bias."""
        B, T, D = x.shape
        assert D == self.size and W.shape == (D, D)
        x2 = x.reshape(B * T, D)
        p = self.p if training else 0.0
        bits = None
        if p > 0.0:
            rng = jax.random.PRNGKey(0) if rng is None else rng
            bits = self._dropout_bits(rng, B * T)
        out = fused_ln_linear_dropout_resid_pallas(
            x2, W, bias, self.a_2, self.b_2, eps=self.eps, p=p, bits=bits)
        return out.reshape(B, T, D)


# ---------------------------------------------------------------------------
# Pure-JAX reference (deterministic, dropout disabled)
# ---------------------------------------------------------------------------
def _reference(x, sublayer, a_2, b_2, eps=1e-6):
    mean = jnp.mean(x, axis=-1, keepdims=True)
    diff = x - mean
    var = jnp.sum(diff * diff, axis=-1, keepdims=True) / (x.shape[-1] - 1)
    std = jnp.sqrt(var)
    normed = a_2.reshape(1, 1, -1) * diff / (std + eps) + b_2.reshape(1, 1, -1)
    return x + sublayer(normed)


if __name__ == "__main__":
    B, T, D = 2, 8, 32          # batch=2, seq=8, hidden=32

    key = jax.random.PRNGKey(0)
    kx, kw, kb = jax.random.split(key, 3)
    x = jax.random.normal(kx, (B, T, D), dtype=jnp.float32)

    # Deterministic example sublayer: linear projection D -> D.
    W = jax.random.normal(kw, (D, D), dtype=jnp.float32) / jnp.sqrt(D)
    bias = jax.random.normal(kb, (D,), dtype=jnp.float32) * 0.1
    sublayer = lambda h: jnp.dot(h, W) + bias

    module = ResidualSkipConnectionWithLayerNorm(size=D, dropout=0.1)
    ref = _reference(x, sublayer, module.a_2, module.b_2, eps=module.eps)

    # 1) eval path (dropout disabled), generic two-kernel route
    out_eval = jax.block_until_ready(module(x, sublayer, training=False))
    assert out_eval.shape == (B, T, D)
    assert jnp.allclose(out_eval, ref, atol=1e-5, rtol=1e-5), "generic eval mismatch"

    # 2) eval path, fused LN+linear+residual kernel
    out_fused = jax.block_until_ready(module.fused_linear(x, W, bias, training=False))
    assert out_fused.shape == (B, T, D)
    assert jnp.allclose(out_fused, ref, atol=5e-4, rtol=5e-4), "fused eval mismatch"

    # 3) training path (dropout active); generic vs fused share the same mask bits
    rng = jax.random.PRNGKey(1234)
    out_train = jax.block_until_ready(module(x, sublayer, rng=rng, training=True))
    out_train_f = jax.block_until_ready(
        module.fused_linear(x, W, bias, rng=rng, training=True))
    assert out_train.shape == (B, T, D) and out_train_f.shape == (B, T, D)
    assert bool(jnp.all(jnp.isfinite(out_train)))
    assert jnp.allclose(out_train, out_train_f, atol=1e-3, rtol=1e-3), \
        "fused training path disagrees with generic path"

    print("KERNEL_OK")
</pallas_src>

<mosaic_0001>
module attributes {stable_mosaic.version = 11 : i64} {
  func.func @_layernorm_kernel(%arg0: i32, %arg1: memref<16x32xf32, #tpu.memory_space<vmem>>, %arg2: memref<1x32xf32, #tpu.memory_space<vmem>>, %arg3: memref<1x32xf32, #tpu.memory_space<vmem>>, %arg4: memref<16x32xf32, #tpu.memory_space<vmem>>) attributes {dimension_semantics = [#tpu.dimension_semantics<parallel>], iteration_bounds = array<i64: 1>, scalar_prefetch = 0 : i64, scratch_operands = 0 : i64, tpu.core_type = #tpu.core_type<tc>, window_params = [{transform_indices = @transform_0, window_bounds = array<i64: 16, 32>}, {pipeline_mode = #tpu.pipeline_mode<synchronous>, transform_indices = @transform_1, window_bounds = array<i64: 1, 32>}, {pipeline_mode = #tpu.pipeline_mode<synchronous>, transform_indices = @transform_2, window_bounds = array<i64: 1, 32>}, {transform_indices = @transform_3, window_bounds = array<i64: 16, 32>}]} {
    %c0 = arith.constant 0 : index
    %c0_0 = arith.constant 0 : index
    %0 = vector.load %arg1[%c0, %c0_0] : memref<16x32xf32, #tpu.memory_space<vmem>>, vector<16x32xf32>
    %cst = arith.constant dense<0.000000e+00> : vector<16xf32>
    %1 = vector.multi_reduction <add>, %0, %cst [1] : vector<16x32xf32> to vector<16xf32>
    %2 = vector.shape_cast %1 : vector<16xf32> to vector<16x1xf32>
    %cst_1 = arith.constant 3.200000e+01 : f32
    %3 = vector.broadcast %cst_1 : f32 to vector<16x1xf32>
    %4 = arith.divf %2, %3 : vector<16x1xf32>
    %5 = vector.broadcast %4 : vector<16x1xf32> to vector<16x32xf32>
    %6 = arith.subf %0, %5 : vector<16x32xf32>
    %7 = arith.mulf %6, %6 : vector<16x32xf32>
    %cst_2 = arith.constant dense<0.000000e+00> : vector<16xf32>
    %8 = vector.multi_reduction <add>, %7, %cst_2 [1] : vector<16x32xf32> to vector<16xf32>
    %9 = vector.shape_cast %8 : vector<16xf32> to vector<16x1xf32>
    %cst_3 = arith.constant 0.0322580636 : f32
    %10 = vector.broadcast %cst_3 : f32 to vector<16x1xf32>
    %11 = arith.mulf %9, %10 : vector<16x1xf32>
    %12 = math.sqrt %11 : vector<16x1xf32>
    %cst_4 = arith.constant 9.99999997E-7 : f32
    %13 = vector.broadcast %cst_4 : f32 to vector<16x1xf32>
    %14 = arith.addf %12, %13 : vector<16x1xf32>
    %cst_5 = arith.constant 1.000000e+00 : f32
    %15 = vector.broadcast %cst_5 : f32 to vector<16x1xf32>
    %16 = arith.divf %15, %14 : vector<16x1xf32>
    %c0_6 = arith.constant 0 : index
    %c0_7 = arith.constant 0 : index
    %17 = vector.load %arg2[%c0_6, %c0_7] : memref<1x32xf32, #tpu.memory_space<vmem>>, vector<1x32xf32>
    %18 = vector.broadcast %16 : vector<16x1xf32> to vector<16x32xf32>
    %19 = arith.mulf %6, %18 : vector<16x32xf32>
    %20 = vector.broadcast %17 : vector<1x32xf32> to vector<16x32xf32>
    %21 = arith.mulf %20, %19 : vector<16x32xf32>
    %c0_8 = arith.constant 0 : index
    %c0_9 = arith.constant 0 : index
    %22 = vector.load %arg3[%c0_8, %c0_9] : memref<1x32xf32, #tpu.memory_space<vmem>>, vector<1x32xf32>
    %23 = vector.broadcast %22 : vector<1x32xf32> to vector<16x32xf32>
    %24 = arith.addf %21, %23 : vector<16x32xf32>
    %c0_10 = arith.constant 0 : index
    %c0_11 = arith.constant 0 : index
    %25 = vector.load %arg4[%c0_10, %c0_11] : memref<16x32xf32, #tpu.memory_space<vmem>>, vector<16x32xf32>
    tpu.vector_store %arg4[%c0_10, %c0_11], %24 {strides = array<i32>} : memref<16x32xf32, #tpu.memory_space<vmem>>, vector<16x32xf32>,
    return
  }
  func.func @transform_0(%arg0: i32) -> (i32, i32) {
    %c0_i32 = arith.constant 0 : i32
    %c0_i32_0 = arith.constant 0 : i32
    return %arg0, %c0_i32 : i32, i32
  }
  func.func @transform_1(%arg0: i32) -> (i32, i32) {
    %c0_i32 = arith.constant 0 : i32
    %c0_i32_0 = arith.constant 0 : i32
    %c0_i32_1 = arith.constant 0 : i32
    return %c0_i32, %c0_i32_0 : i32, i32
  }
  func.func @transform_2(%arg0: i32) -> (i32, i32) {
    %c0_i32 = arith.constant 0 : i32
    %c0_i32_0 = arith.constant 0 : i32
    %c0_i32_1 = arith.constant 0 : i32
    return %c0_i32, %c0_i32_0 : i32, i32
  }
  func.func @transform_3(%arg0: i32) -> (i32, i32) {
    %c0_i32 = arith.constant 0 : i32
    %c0_i32_0 = arith.constant 0 : i32
    return %arg0, %c0_i32 : i32, i32
  }
}

</mosaic_0001>

<llo_original>
// kernel: tpu_custom_call.1
$region0: #{tpu_custom_call.1}
  #allocation0 [shape = 'u32[]', space=smem, size = 0x4, offset = 0x4, fixed_abs, tag = 'smem constant byte address 0x4 - core index']
  #allocation1 [shape = 'u32[144,128]{1,0:T(1,128)}', space=vmem, size = 0x12000, scoped, tag = 'internal scratch']
  %s0 = inlined_call_operand.hbm [shape: f32[16,32], index: 0, kind: input, shape index: {}]
  %s1 = inlined_call_operand.vmem [shape: f32[1,32], index: 1, kind: input, shape index: {}]
  %s2 = inlined_call_operand.vmem [shape: f32[1,32], index: 2, kind: input, shape index: {}]
  %s3 = inlined_call_operand.hbm [shape: f32[16,32], index: 3, kind: output, shape index: {}]
  %s4 = sld [smem:[#allocation0]]
  $region26: #{tpu_custom_call.1} parent=0
    _
  %s6 = ssub.s32 1, %s4
  %s7 = scalar_select 0, %s6, %s4
  $region1: #{tpu_custom_call.1} parent=0
    #allocation2 [shape = 'u8[8192]{0}', space=vmem, size = 0x2000, scoped, tag = 'input window, operand 0, single buffered']
    #allocation3 [shape = 's32[1]{0}', space=sflag, size = 0x4, scoped, tag = 'scoped memory for tpu_custom_call.1']
    #allocation4 [shape = 's32[1]{0}', space=sflag, size = 0x4, scoped, tag = 'scoped memory for tpu_custom_call.1']
    #allocation5 [shape = 'u8[8192]{0}', space=vmem, size = 0x2000, scoped, tag = 'output window, operand 0, single buffered']
    %8 = vsyncpa [#allocation3], 0
    %9 = vsyncpa [#allocation4], 0
    // Predicated region
    $region2: #{tpu_custom_call.1} parent=1 // pred_check
      _
    $region3: #{tpu_custom_call.1} parent=1 // pred_check_branch
      %11 = sbr.rel (0) target = $region5
    $region4: #{tpu_custom_call.1} parent=1 // pred_region
      %s13 = ssub.s32 256, 256
      %14 = vsyncadd [#allocation3], %s13
      %s15 = sshll.u32 [#allocation2], 4
      %s16 = int_to_ptr.vmem [resolvable:$true] %s15
      %21 = dma.hbm_to_vmem [thread:$0]  %s0, 256, %s16, [#allocation3], 128, 128, 8
    $region5: #{tpu_custom_call.1} parent=1 // pred_fallthru
      _
    // Predicated region
    $region6: #{tpu_custom_call.1} parent=1 // pred_check
      _
    $region7: #{tpu_custom_call.1} parent=1 // pred_check_branch
      %23 = sbr.rel (0) target = $region9
    $region8: #{tpu_custom_call.1} parent=1 // pred_region
      _
    $region9: #{tpu_custom_call.1} parent=1 // pred_fallthru
      _
    // Predicated region
    $region10: #{tpu_custom_call.1} parent=1 // pred_check
      _
    $region11: #{tpu_custom_call.1} parent=1 // pred_check_branch
      %25 = sbr.rel (0) target = $region13
    $region12: #{tpu_custom_call.1} parent=1 // pred_region
      _
    $region13: #{tpu_custom_call.1} parent=1 // pred_fallthru
      _
    // Predicated region
    $region14: #{tpu_custom_call.1} parent=1 // pred_check
      _
    $region15: #{tpu_custom_call.1} parent=1 // pred_check_branch
      %27 = sbr.rel (0) target = $region17
    $region16: #{tpu_custom_call.1} parent=1 // pred_region
      %28 = dma.done [#allocation3], 256
    $region17: #{tpu_custom_call.1} parent=1 // pred_fallthru
      _
    %v29 = vld [vmem:[#allocation2] sm:$0xff]
    %v30 = vld [vmem:[#allocation2 + $0x8] sm:$0xff]
    %vm31 = vcmask 261120
    %v32 = vsel %vm31, %v29, 0.0
    %33 = vadd.xlane.f32.xlu0 %v32
    %v34 = vpop.xlane.xlu0 %33
    %v35 = vsel %vm31, %v30, 0.0
    %36 = vadd.xlane.f32.xlu0 %v35
    %v37 = vpop.xlane.xlu0 %36
    %v38 = vrcp.pop 32.0
    %v39 = vmul.f32 %v34, %v38
    %v40 = vmul.f32 %v37, %v38
    %v41 = vsub.f32 %v29, %v39
    %v42 = vsub.f32 %v30, %v40
    %v43 = vmul.f32 %v41, %v41
    %v44 = vmul.f32 %v42, %v42
    %v45 = vsel %vm31, %v43, 0.0
    %46 = vadd.xlane.f32.xlu0 %v45
    %v47 = vpop.xlane.xlu0 %46
    %v48 = vsel %vm31, %v44, 0.0
    %49 = vadd.xlane.f32.xlu0 %v48
    %v50 = vpop.xlane.xlu0 %49
    %v51 = vmul.f32 %v47, 0.032258064
    %v52 = vmul.f32 %v50, 0.032258064
    %v53 = vrsqrt.pop %v51
    %v54 = vmul.f32 %v51, %v53
    %vm55 = vcmp.eq.f32.partialorder %v51, inf
    %v56 = vsel %vm55, %v51, %v54
    %vm57 = vcmp.eq.f32.partialorder %v51, 0.0
    %v58 = vand.u32 %v51, 2147483648
    %v59 = vsel %vm57, %v58, %v56
    %v60 = vrsqrt.pop %v52
    %v61 = vmul.f32 %v52, %v60
    %vm62 = vcmp.eq.f32.partialorder %v52, inf
    %v63 = vsel %vm62, %v52, %v61
    %vm64 = vcmp.eq.f32.partialorder %v52, 0.0
    %v65 = vand.u32 %v52, 2147483648
    %v66 = vsel %vm64, %v65, %v63
    %v67 = vadd.f32 %v59, 1e-06
    %v68 = vadd.f32 %v66, 1e-06
    %v69 = vrcp.pop %v67
    %v70 = vmul.f32 1.0, %v69
    %v71 = vrcp.pop %v68
    %v72 = vmul.f32 1.0, %v71
    %v73 = vld [vmem:[%s1] sm:$0x1]
    %v74 = vmul.f32 %v41, %v70
    %v75 = vmul.f32 %v42, %v72
    %v77 = vlaneseq
    %v78 = vshrl.u32 %v77, 7
    %v79 = vsub.s32 0, %v78
    %v80 = vrot.slane %v73, %v79
    %v82 = vmul.f32 %v80, %v74
    %v83 = vmul.f32 %v80, %v75
    %v84 = vld [vmem:[%s2] sm:$0x1]
    %v86 = vlaneseq
    %v87 = vshrl.u32 %v86, 7
    %v88 = vsub.s32 0, %v87
    %v89 = vrot.slane %v84, %v88
    %v91 = vadd.f32 %v82, %v89
    %v92 = vadd.f32 %v83, %v89
    %93 = vst.msk [vmem:[#allocation5] sm:$0xff] %vm31, %v91
    %94 = vst.msk [vmem:[#allocation5 + $0x8] sm:$0xff] %vm31, %v92
    // Predicated region
    $region18: #{tpu_custom_call.1} parent=1 // pred_check
      _
    $region19: #{tpu_custom_call.1} parent=1 // pred_check_branch
      %96 = sbr.rel (0) target = $region21
    $region20: #{tpu_custom_call.1} parent=1 // pred_region
      %s98 = ssub.s32 256, 256
      %99 = vsyncadd [#allocation4], %s98
      %s100 = sshll.u32 [#allocation5], 4
      %s101 = int_to_ptr.vmem [resolvable:$true] %s100
      %106 = dma.vmem_to_hbm [thread:$0]  %s101, 256, %s3, [#allocation4], 128, 128, 8
    $region21: #{tpu_custom_call.1} parent=1 // pred_fallthru
      _
    // Predicated region
    $region22: #{tpu_custom_call.1} parent=1 // pred_check
      _
    $region23: #{tpu_custom_call.1} parent=1 // pred_check_branch
      %108 = sbr.rel (0) target = $region25
    $region24: #{tpu_custom_call.1} parent=1 // pred_region
      %109 = dma.done [#allocation4], 256
    $region25: #{tpu_custom_call.1} parent=1 // pred_fallthru
      _
    %110 = vsyncpa [#allocation3], 1
    %111 = vsyncpa [#allocation4], 1

</llo_original>
